<compile_context>
chip_gen: v6e
topology: v6e:2x2x1
jax: 0.10.0
libtpu: 0.0.40
codegen_flags: <defaults>
</compile_context>

<pallas_src>
import jax
import jax.numpy as jnp
import numpy as np
from jax import lax
from jax.experimental import pallas as pl
from jax.experimental.pallas import tpu as pltpu


def _round_up(x, m):
    return ((x + m - 1) // m) * m


def _tcn_matmul_kernel(x_ref, w_ref, b_ref, o_ref):
    # x_ref: (tile_rows, K*C_in)  bf16   im2col rows for this (n, row-tile)
    # w_ref: (K*C_in, Cp)         bf16   conv weights with BN scale folded in
    # b_ref: (1, Cp)              f32    folded conv-bias + BN shift
    # o_ref: (tile_rows, Cp)             lane-dense output tile
    acc = jnp.dot(x_ref[...], w_ref[...], preferred_element_type=jnp.float32)
    o_ref[...] = (acc + b_ref[...]).astype(o_ref.dtype)


def unit_tcn_forward(
    x_nchw,        # (N, C_in, T, V)
    conv_weight,   # (C_out, C_in, K, 1)
    conv_bias,     # (C_out,)
    bn_gamma,      # (C_out,)
    bn_beta,       # (C_out,)
    bn_mean,       # (C_out,)
    bn_var,        # (C_out,)
    *,
    stride=1,
    eps=1e-5,
    tile_rows=256,  # rows of (T_out*V) per grid step; tunable
):
    N, C_in, T, V = x_nchw.shape
    C_out, _, K, _ = conv_weight.shape
    pad = (K - 1) // 2
    T_out = (T + 2 * pad - K) // stride + 1

    # ---- wrapper-side layout plumbing (no FLOPs) ----
    # NCHW -> NTVC, pad T.
    x = jnp.transpose(x_nchw, (0, 2, 3, 1))                   # (N, T, V, C_in)
    x_pad = jnp.pad(x, ((0, 0), (pad, pad), (0, 0), (0, 0)))  # (N, T_pad, V, C_in)

    # im2col over temporal taps (stride baked in here, not in the kernel):
    # x_col[n, t*V+v, k*C_in + c] = x_pad[n, t*stride + k, v, c]
    taps = [
        x_pad[:, k : k + (T_out - 1) * stride + 1 : stride, :, :] for k in range(K)
    ]
    KC = K * C_in
    rows = T_out * V
    x_col = jnp.concatenate(taps, axis=-1).reshape(N, rows, KC)

    # Fold BN (eval mode) + conv bias; fold the BN scale directly into weights.
    inv_std = 1.0 / jnp.sqrt(bn_var.astype(jnp.float32) + eps)
    scale = bn_gamma.astype(jnp.float32) * inv_std                      # (C_out,)
    bias = (conv_bias.astype(jnp.float32) - bn_mean.astype(jnp.float32)) * scale \
        + bn_beta.astype(jnp.float32)                                   # (C_out,)

    # (C_out, C_in, K) -> (K, C_in, C_out) -> (K*C_in, C_out), matching im2col order.
    w = jnp.transpose(conv_weight[:, :, :, 0].astype(jnp.float32), (2, 1, 0))
    w = w.reshape(KC, C_out) * scale[None, :]

    # Lane-dense channels: pad C_out up to a multiple of 128.
    Cp = _round_up(C_out, 128)
    w = jnp.pad(w, ((0, 0), (0, Cp - C_out)))
    bias_p = jnp.pad(bias, (0, Cp - C_out)).reshape(1, Cp)

    # Row tiling for the second (parallel) grid axis; pad rows to a tile multiple.
    tile_r = min(tile_rows, _round_up(rows, 8))   # both multiples of 8
    rows_p = _round_up(rows, tile_r)
    x_col = jnp.pad(x_col, ((0, 0), (0, rows_p - rows), (0, 0)))

    # bf16 operands for the MXU (accumulation stays f32 inside the kernel).
    x_col = x_col.astype(jnp.bfloat16)
    w = w.astype(jnp.bfloat16)

    grid = (N, rows_p // tile_r)

    out = pl.pallas_call(
        _tcn_matmul_kernel,
        out_shape=jax.ShapeDtypeStruct((N, rows_p, Cp), x_nchw.dtype),
        grid_spec=pltpu.PrefetchScalarGridSpec(
            num_scalar_prefetch=0,
            grid=grid,
            in_specs=[
                pl.BlockSpec((None, tile_r, KC), lambda n, r: (n, r, 0)),
                pl.BlockSpec((KC, Cp), lambda n, r: (0, 0)),
                pl.BlockSpec((1, Cp), lambda n, r: (0, 0)),
            ],
            out_specs=pl.BlockSpec((None, tile_r, Cp), lambda n, r: (n, r, 0)),
        ),
        compiler_params=pltpu.CompilerParams(
            dimension_semantics=("parallel", "parallel"),
            vmem_limit_bytes=64 * 1024 * 1024,  # tiles are small; ample headroom
        ),
    )(x_col, w, bias_p)

    # Strip row/channel padding, back to NCHW.
    out = out[:, :rows, :C_out].reshape(N, T_out, V, C_out)
    return jnp.transpose(out, (0, 3, 1, 2))


def _reference(x, w, b, gamma, beta, mean, var, *, stride=1, eps=1e-5):
    K = w.shape[2]
    pad = (K - 1) // 2
    y = lax.conv_general_dilated(
        x.astype(jnp.float32),
        w.astype(jnp.float32),
        window_strides=(stride, 1),
        padding=((pad, pad), (0, 0)),
        dimension_numbers=("NCHW", "OIHW", "NCHW"),
    )
    y = y + b[None, :, None, None]
    inv_std = 1.0 / jnp.sqrt(var + eps)
    return (y - mean[None, :, None, None]) * (gamma * inv_std)[None, :, None, None] \
        + beta[None, :, None, None]


if __name__ == "__main__":
    # Small shapes consistent with unit_tcn: x is NCHW = (N, C_in, T, V)
    N, C_in, C_out, T, V = 2, 4, 8, 16, 16
    K, stride = 9, 1

    key = jax.random.PRNGKey(0)
    kx, kw = jax.random.split(key)

    x = jax.random.normal(kx, (N, C_in, T, V), dtype=jnp.float32)

    # conv_init: kaiming_normal_(mode='fan_out') -> std = sqrt(2 / fan_out),
    # fan_out = C_out * K * 1 ; conv bias = 0.
    fan_out = C_out * K * 1
    conv_weight = jax.random.normal(kw, (C_out, C_in, K, 1), dtype=jnp.float32) \
        * jnp.sqrt(2.0 / fan_out)
    conv_bias = jnp.zeros((C_out,), dtype=jnp.float32)

    # bn_init(bn, 1): weight=1, bias=0 ; fresh running stats: mean=0, var=1.
    bn_gamma = jnp.ones((C_out,), dtype=jnp.float32)
    bn_beta = jnp.zeros((C_out,), dtype=jnp.float32)
    bn_mean = jnp.zeros((C_out,), dtype=jnp.float32)
    bn_var = jnp.ones((C_out,), dtype=jnp.float32)

    out = unit_tcn_forward(
        x, conv_weight, conv_bias, bn_gamma, bn_beta, bn_mean, bn_var,
        stride=stride,
    )
    out = jax.block_until_ready(out)

    ref = _reference(
        x, conv_weight, conv_bias, bn_gamma, bn_beta, bn_mean, bn_var,
        stride=stride,
    )
    # bf16 MXU operands (f32 accumulation) -> loosened tolerance vs f32 reference.
    np.testing.assert_allclose(np.asarray(out), np.asarray(ref), rtol=2e-2, atol=3e-2)
    assert out.shape == (N, C_out, T, V), out.shape

    print("KERNEL_OK")
</pallas_src>

<mosaic_0001>
module attributes {stable_mosaic.version = 11 : i64} {
  func.func @_tcn_matmul_kernel(%arg0: i32, %arg1: i32, %arg2: memref<1x256x36xbf16, #tpu.memory_space<vmem>>, %arg3: memref<36x128xbf16, #tpu.memory_space<vmem>>, %arg4: memref<1x128xf32, #tpu.memory_space<vmem>>, %arg5: memref<1x256x128xf32, #tpu.memory_space<vmem>>) attributes {dimension_semantics = [#tpu.dimension_semantics<parallel>, #tpu.dimension_semantics<parallel>], iteration_bounds = array<i64: 2, 1>, scalar_prefetch = 0 : i64, scratch_operands = 0 : i64, tpu.core_type = #tpu.core_type<tc>, window_params = [{transform_indices = @transform_0, window_bounds = array<i64: 1, 256, 36>}, {pipeline_mode = #tpu.pipeline_mode<synchronous>, transform_indices = @transform_1, window_bounds = array<i64: 36, 128>}, {pipeline_mode = #tpu.pipeline_mode<synchronous>, transform_indices = @transform_2, window_bounds = array<i64: 1, 128>}, {transform_indices = @transform_3, window_bounds = array<i64: 1, 256, 128>}]} {
    %c0 = arith.constant 0 : index
    %c0_0 = arith.constant 0 : index
    %c0_1 = arith.constant 0 : index
    %0 = vector.load %arg2[%c0, %c0_0, %c0_1] : memref<1x256x36xbf16, #tpu.memory_space<vmem>>, vector<1x256x36xbf16>
    %1 = vector.shape_cast %0 : vector<1x256x36xbf16> to vector<256x36xbf16>
    %c0_2 = arith.constant 0 : index
    %c0_3 = arith.constant 0 : index
    %2 = vector.load %arg3[%c0_2, %c0_3] : memref<36x128xbf16, #tpu.memory_space<vmem>>, vector<36x128xbf16>
    %cst = arith.constant dense<0.000000e+00> : vector<256x128xf32>
    %3 = tpu.matmul %1, %2, %cst {dimension_numbers = #tpu.dot_dimension_numbers<[1], [0], [0], [1], [0, 0, 1, 1], [], []>} : vector<256x36xbf16>, vector<36x128xbf16>, vector<256x128xf32> -> vector<256x128xf32>
    %c0_4 = arith.constant 0 : index
    %c0_5 = arith.constant 0 : index
    %4 = vector.load %arg4[%c0_4, %c0_5] : memref<1x128xf32, #tpu.memory_space<vmem>>, vector<1x128xf32>
    %5 = vector.broadcast %4 : vector<1x128xf32> to vector<256x128xf32>
    %6 = arith.addf %3, %5 : vector<256x128xf32>
    %c0_6 = arith.constant 0 : index
    %c0_7 = arith.constant 0 : index
    %c0_8 = arith.constant 0 : index
    %7 = vector.load %arg5[%c0_6, %c0_7, %c0_8] : memref<1x256x128xf32, #tpu.memory_space<vmem>>, vector<1x256x128xf32>
    %8 = vector.shape_cast %7 : vector<1x256x128xf32> to vector<256x128xf32>
    %9 = vector.shape_cast %6 : vector<256x128xf32> to vector<1x256x128xf32>
    tpu.vector_store %arg5[%c0_6, %c0_7, %c0_8], %9 {strides = array<i32>} : memref<1x256x128xf32, #tpu.memory_space<vmem>>, vector<1x256x128xf32>,
    return
  }
  func.func @transform_0(%arg0: i32, %arg1: i32) -> (i32, i32, i32) {
    %c0_i32 = arith.constant 0 : i32
    %c0_i32_0 = arith.constant 0 : i32
    return %arg0, %arg1, %c0_i32 : i32, i32, i32
  }
  func.func @transform_1(%arg0: i32, %arg1: i32) -> (i32, i32) {
    %c0_i32 = arith.constant 0 : i32
    %c0_i32_0 = arith.constant 0 : i32
    %c0_i32_1 = arith.constant 0 : i32
    return %c0_i32, %c0_i32_0 : i32, i32
  }
  func.func @transform_2(%arg0: i32, %arg1: i32) -> (i32, i32) {
    %c0_i32 = arith.constant 0 : i32
    %c0_i32_0 = arith.constant 0 : i32
    %c0_i32_1 = arith.constant 0 : i32
    return %c0_i32, %c0_i32_0 : i32, i32
  }
  func.func @transform_3(%arg0: i32, %arg1: i32) -> (i32, i32, i32) {
    %c0_i32 = arith.constant 0 : i32
    %c0_i32_0 = arith.constant 0 : i32
    return %arg0, %arg1, %c0_i32 : i32, i32, i32
  }
}

</mosaic_0001>

<llo_original>
// kernel: tpu_custom_call.1
$region0: #{tpu_custom_call.1}
  #allocation0 [shape = 'u32[]', space=smem, size = 0x4, offset = 0x4, fixed_abs, tag = 'smem constant byte address 0x4 - core index']
  #allocation1 [shape = 'u32[144,128]{1,0:T(1,128)}', space=vmem, size = 0x12000, scoped, tag = 'internal scratch']
  %s0 = inlined_call_operand.vmem [shape: bf16[2,256,36], index: 0, kind: input, shape index: {}]
  %s1 = inlined_call_operand.vmem [shape: bf16[36,128], index: 1, kind: input, shape index: {}]
  %s2 = inlined_call_operand.vmem [shape: f32[1,128], index: 2, kind: input, shape index: {}]
  %s3 = inlined_call_operand.hbm [shape: f32[2,256,128], index: 3, kind: output, shape index: {}]
  %s4 = sld [smem:[#allocation0]]
  $region45: #{tpu_custom_call.1} parent=0
    _
  %s6 = ssub.s32 1, %s4
  %s7 = scalar_select 0, %s6, %s4
  $region1: #{tpu_custom_call.1} parent=0
    #allocation2 [shape = 'u8[262144]{0}', space=vmem, size = 0x40000, scoped, tag = 'output window, operand 0']
    #allocation3 [shape = 's32[2]{0}', space=sflag, size = 0x8, scoped, tag = 'scoped memory for tpu_custom_call.1']
    %8 = vsyncpa [#allocation3], 0
    %s9 = scalar_lea.sflag [#allocation3], 1
    %10 = vsyncpa %s9, 0
    loop: start=0, step=1, limit=4
    $region2: #{tpu_custom_call.1} parent=1 // loop_pre_header
      _
    $region3: #{tpu_custom_call.1} parent=1 // loop_header
      %s12 = sphi 0, %s16
      %p13 = scmp.ge.s32.totalorder %s12, 4
      %s19 = sphi 0, %s31
      %s20 = sphi 0, %s27
      %s21 = sphi 0, %s19
      %s22 = sphi 0, %s20
      %s23 = sphi 0, %s21
      %s24 = sphi 0, %s22
      %s36 = sphi 0, %s38
      %s39 = sphi 0, %s36
      %s40 = sphi 0, %s39
      %s56 = sphi 0, %s40
      %s60 = sphi 0, %s60
      %s62 = sphi 0, %s60
      %s63 = sphi 0, %s62
      %s77 = sphi 0, %s63
      %s81 = sphi 0, %s81
      %s83 = sphi 0, %s81
      %s84 = sphi 0, %s83
      %s98 = sphi 0, %s84
      %s106 = sphi 0, %s108
      %s109 = sphi 0, %s106
      %s110 = sphi 0, %s109
      %s126 = sphi 0, %s110
    $region4: #{tpu_custom_call.1} parent=1 // loop_header_branch
      %15 = sbr.rel (%p13) target = $region8
    $region5: #{tpu_custom_call.1} parent=1 // loop_body
      %s17 = ssub.s32 %s12, 1
      %s18 = ssub.s32 %s12, 2
      %s25 = sadd.s32 1, %s20
      %p26 = scmp.ge.s32.totalorder %s25, 1
      %s27 = scalar_select %p26, 0, %s25
      %s28 = sadd.s32 1, %s19
      %s29 = scalar_select %p26, %s28, %s19
      %p30 = scmp.ge.s32.totalorder %s29, 2
      %s31 = scalar_select %p30, 0, %s29
      %s32 = ssub.s32 %s19, %s31
      %s33 = ssub.s32 %s20, %s27
      %s34 = sor.u32 %s32, %s33
      %p35 = scmp.eq.s32.totalorder %s34, 0
      %s37 = sadd.s32 %s36, 1
      %s38 = scalar_select %p35, %s36, %s37
      %p41 = pneg %p35
      %p42 = scmp.eq.s32.totalorder %s12, 1
      %p43 = por %p41, %p42
      %p44 = scmp.ne.s32.totalorder %s36, %s39
      %p45 = scmp.eq.s32.totalorder %s12, 0
      %p46 = por %p44, %p45
      %p47 = scmp.ne.s32.totalorder %s36, %s39
      %p48 = scmp.eq.s32.totalorder %s17, 1
      %p49 = por %p47, %p48
      %p50 = scmp.ne.s32.totalorder %s39, %s40
      %p51 = scmp.eq.s32.totalorder %s17, 0
      %p52 = por %p50, %p51
      %p53 = scmp.ne.s32.totalorder %s39, %s40
      %p54 = scmp.eq.s32.totalorder %s18, 1
      %p55 = por %p53, %p54
      %p57 = scmp.ne.s32.totalorder %s40, %s56
      %p58 = scmp.eq.s32.totalorder %s18, 0
      %p59 = por %p57, %p58
      %s61 = sadd.s32 %s60, 1
      %p64 = scmp.eq.s32.totalorder %s12, 1
      %p65 = scmp.ne.s32.totalorder %s60, %s62
      %p66 = scmp.eq.s32.totalorder %s12, 0
      %p67 = por %p65, %p66
      %p68 = scmp.ne.s32.totalorder %s60, %s62
      %p69 = scmp.eq.s32.totalorder %s17, 1
      %p70 = por %p68, %p69
      %p71 = scmp.ne.s32.totalorder %s62, %s63
      %p72 = scmp.eq.s32.totalorder %s17, 0
      %p73 = por %p71, %p72
      %p74 = scmp.ne.s32.totalorder %s62, %s63
      %p75 = scmp.eq.s32.totalorder %s18, 1
      %p76 = por %p74, %p75
      %p78 = scmp.ne.s32.totalorder %s63, %s77
      %p79 = scmp.eq.s32.totalorder %s18, 0
      %p80 = por %p78, %p79
      %s82 = sadd.s32 %s81, 1
      %p85 = scmp.eq.s32.totalorder %s12, 1
      %p86 = scmp.ne.s32.totalorder %s81, %s83
      %p87 = scmp.eq.s32.totalorder %s12, 0
      %p88 = por %p86, %p87
      %p89 = scmp.ne.s32.totalorder %s81, %s83
      %p90 = scmp.eq.s32.totalorder %s17, 1
      %p91 = por %p89, %p90
      %p92 = scmp.ne.s32.totalorder %s83, %s84
      %p93 = scmp.eq.s32.totalorder %s17, 0
      %p94 = por %p92, %p93
      %p95 = scmp.ne.s32.totalorder %s83, %s84
      %p96 = scmp.eq.s32.totalorder %s18, 1
      %p97 = por %p95, %p96
      %p99 = scmp.ne.s32.totalorder %s84, %s98
      %p100 = scmp.eq.s32.totalorder %s18, 0
      %p101 = por %p99, %p100
      %s102 = ssub.s32 %s19, %s31
      %s103 = ssub.s32 %s20, %s27
      %s104 = sor.u32 %s102, %s103
      %p105 = scmp.eq.s32.totalorder %s104, 0
      %s107 = sadd.s32 %s106, 1
      %s108 = scalar_select %p105, %s106, %s107
      %p111 = pneg %p105
      %p112 = scmp.eq.s32.totalorder %s12, 1
      %p113 = por %p111, %p112
      %p114 = scmp.ne.s32.totalorder %s106, %s109
      %p115 = scmp.eq.s32.totalorder %s12, 0
      %p116 = por %p114, %p115
      %p117 = scmp.ne.s32.totalorder %s106, %s109
      %p118 = scmp.eq.s32.totalorder %s17, 1
      %p119 = por %p117, %p118
      %p120 = scmp.ne.s32.totalorder %s109, %s110
      %p121 = scmp.eq.s32.totalorder %s17, 0
      %p122 = por %p120, %p121
      %p123 = scmp.ne.s32.totalorder %s109, %s110
      %p124 = scmp.eq.s32.totalorder %s18, 1
      %p125 = por %p123, %p124
      %p127 = scmp.ne.s32.totalorder %s110, %s126
      %p128 = scmp.eq.s32.totalorder %s18, 0
      %p129 = por %p127, %p128
      %p130 = scmp.le.s32.totalorder 1, %s12
      %p131 = scmp.lt.s32.totalorder %s12, 3
      %p132 = pnand %p130, %p131
      %p133 = pneg %p132
      // Predicated region
      $region9: #{tpu_custom_call.1} parent=5 // pred_check
        _
      $region10: #{tpu_custom_call.1} parent=5 // pred_check_branch
        %135 = sbr.rel (%p132) target = $region12
      $region11: #{tpu_custom_call.1} parent=5 // pred_region
        %s136 = ssub.s32 %s12, 1
        // Predicated region
        $region13: #{tpu_custom_call.1} parent=11 // pred_check
          %p137 = pneg %p73
        $region14: #{tpu_custom_call.1} parent=11 // pred_check_branch
          %139 = sbr.rel (%p137) target = $region16
        $region15: #{tpu_custom_call.1} parent=11 // pred_region
          _
        $region16: #{tpu_custom_call.1} parent=11 // pred_fallthru
          _
        // Predicated region
        $region17: #{tpu_custom_call.1} parent=11 // pred_check
          %p140 = pneg %p94
        $region18: #{tpu_custom_call.1} parent=11 // pred_check_branch
          %142 = sbr.rel (%p140) target = $region20
        $region19: #{tpu_custom_call.1} parent=11 // pred_region
          _
        $region20: #{tpu_custom_call.1} parent=11 // pred_fallthru
          _
      $region12: #{tpu_custom_call.1} parent=5 // pred_fallthru
        _
      %p143 = scmp.lt.s32.totalorder %s12, 2
      // Predicated region
      $region21: #{tpu_custom_call.1} parent=5 // pred_check
        %p144 = pneg %p143
      $region22: #{tpu_custom_call.1} parent=5 // pred_check_branch
        %146 = sbr.rel (%p144) target = $region24
      $region23: #{tpu_custom_call.1} parent=5 // pred_region
        // Predicated region
        $region25: #{tpu_custom_call.1} parent=23 // pred_check
          %p147 = pneg %p46
        $region26: #{tpu_custom_call.1} parent=23 // pred_check_branch
          %149 = sbr.rel (%p147) target = $region28
        $region27: #{tpu_custom_call.1} parent=23 // pred_region
          %s150 = smul.u32 32, %s20
          %p151 = scmp.lt.s32.totalorder %s19, 1
          %s152 = scalar_select %p151, %s19, 1
          %p153 = scmp.lt.s32.totalorder %s150, 31
          %s154 = scalar_select %p153, %s150, 31
          %s155 = smul.addr %s152, 32
          %s156 = sadd.s32 %s154, %s155
          %s157 = smul.addr %s156, 4
          %s158 = scalar_lea.vmem %s0, %s157
          %s159 = smul.u32 32, %s20
        $region28: #{tpu_custom_call.1} parent=23 // pred_fallthru
          _
      $region24: #{tpu_custom_call.1} parent=5 // pred_fallthru
        _
      %p160 = scmp.le.s32.totalorder 1, %s12
      %p161 = scmp.lt.s32.totalorder %s12, 3
      %p162 = pnand %p160, %p161
      %p163 = pneg %p162
      // Predicated region
      $region29: #{tpu_custom_call.1} parent=5 // pred_check
        _
      $region30: #{tpu_custom_call.1} parent=5 // pred_check_branch
        %165 = sbr.rel (%p162) target = $region32
      $region31: #{tpu_custom_call.1} parent=5 // pred_region
        %s166 = ssub.s32 %s12, 1
        %s167 = smul.u32 32, %s22
        %p168 = scmp.lt.s32.totalorder %s21, 1
        %s169 = scalar_select %p168, %s21, 1
        %p170 = scmp.lt.s32.totalorder %s167, 31
        %s171 = scalar_select %p170, %s167, 31
        %s172 = smul.addr %s169, 32
        %s173 = sadd.s32 %s171, %s172
        %s174 = smul.addr %s173, 4
        %s175 = scalar_lea.vmem %s0, %s174
        %p176 = pneg %p52
        %p177 = pneg %p49
        %p178 = pneg %p73
        %p179 = pneg %p70
        %p180 = pneg %p94
        %p181 = pneg %p91
        %p182 = pneg %p122
        %p183 = pneg %p119
        %s184 = sand.u32 %s109, 1
        %s185 = scalar_lea.sflag [#allocation3], %s184
        %s186 = sand.u32 %s109, 1
        %s187 = smul.addr %s186, 256
        %s188 = scalar_lea.vmem [#allocation2], %s187
        %s189 = smul.u32 32, %s22
        %p190 = scmp.lt.s32.totalorder %s21, 1
        %s191 = scalar_select %p190, %s21, 1
        %p192 = scmp.lt.s32.totalorder %s189, 31
        %s193 = scalar_select %p192, %s189, 31
        %s194 = smul.addr %s191, 32
        %s195 = sadd.s32 %s193, %s194
        %s196 = smul.addr %s195, 4
        %s197 = scalar_lea.vmem %s0, %s196
        %s198 = smul.u32 32, %s22
        %s199 = smul.u32 32, %s22
        %v201 = vld [vmem:[%s197] sm:$0xf]
        %v202 = vld [vmem:[%s197 + $0x4] sm:$0xf]
        %v203 = vld [vmem:[%s197 + $0x8] sm:$0xf]
        %v204 = vld [vmem:[%s197 + $0xc] sm:$0xf]
        %v205 = vld [vmem:[%s197 + $0x10] sm:$0xf]
        %v206 = vld [vmem:[%s197 + $0x14] sm:$0xf]
        %v207 = vld [vmem:[%s197 + $0x18] sm:$0xf]
        %v208 = vld [vmem:[%s197 + $0x1c] sm:$0xf]
        %v209 = vld [vmem:[%s197 + $0x20] sm:$0xf]
        %v210 = vld [vmem:[%s197 + $0x24] sm:$0xf]
        %v211 = vld [vmem:[%s197 + $0x28] sm:$0xf]
        %v212 = vld [vmem:[%s197 + $0x2c] sm:$0xf]
        %v213 = vld [vmem:[%s197 + $0x30] sm:$0xf]
        %v214 = vld [vmem:[%s197 + $0x34] sm:$0xf]
        %v215 = vld [vmem:[%s197 + $0x38] sm:$0xf]
        %v216 = vld [vmem:[%s197 + $0x3c] sm:$0xf]
        %v217 = vld [vmem:[%s197 + $0x40] sm:$0xf]
        %v218 = vld [vmem:[%s197 + $0x44] sm:$0xf]
        %v219 = vld [vmem:[%s197 + $0x48] sm:$0xf]
        %v220 = vld [vmem:[%s197 + $0x4c] sm:$0xf]
        %v221 = vld [vmem:[%s197 + $0x50] sm:$0xf]
        %v222 = vld [vmem:[%s197 + $0x54] sm:$0xf]
        %v223 = vld [vmem:[%s197 + $0x58] sm:$0xf]
        %v224 = vld [vmem:[%s197 + $0x5c] sm:$0xf]
        %v225 = vld [vmem:[%s197 + $0x60] sm:$0xf]
        %v226 = vld [vmem:[%s197 + $0x64] sm:$0xf]
        %v227 = vld [vmem:[%s197 + $0x68] sm:$0xf]
        %v228 = vld [vmem:[%s197 + $0x6c] sm:$0xf]
        %v229 = vld [vmem:[%s197 + $0x70] sm:$0xf]
        %v230 = vld [vmem:[%s197 + $0x74] sm:$0xf]
        %v231 = vld [vmem:[%s197 + $0x78] sm:$0xf]
        %v232 = vld [vmem:[%s197 + $0x7c] sm:$0xf]
        %v233 = vld [vmem:[%s1] sm:$0xf]
        %v234 = vld [vmem:[%s1 + $0x4] sm:$0xf]
        %v235 = vld [vmem:[%s1 + $0x8] sm:$0xf]
        %v236 = vld [vmem:[%s1 + $0xc] sm:$0xf]
        %v237 = vld [vmem:[%s1 + $0x10] sm:$0x3]
        %v238 = vld [vmem:[%s2] sm:$0x1]
        %v240 = vlaneseq
        %v241 = vshrl.u32 %v240, 7
        %v242 = vsub.s32 0, %v241
        %v243 = vrot.slane %v238, %v242
        %v277 = vunpack.c.l.b16 %v201
        %v278 = vunpack.c.l.b16 %v202
        %v279 = vunpack.c.l.b16 %v203
        %v280 = vunpack.c.l.b16 %v204
        %v281 = vunpack.c.l.b16 %v205
        %v282 = vunpack.c.l.b16 %v206
        %v283 = vunpack.c.l.b16 %v207
        %v284 = vunpack.c.l.b16 %v208
        %v285 = vunpack.c.l.b16 %v209
        %v286 = vunpack.c.l.b16 %v210
        %v287 = vunpack.c.l.b16 %v211
        %v288 = vunpack.c.l.b16 %v212
        %v289 = vunpack.c.l.b16 %v213
        %v290 = vunpack.c.l.b16 %v214
        %v291 = vunpack.c.l.b16 %v215
        %v292 = vunpack.c.l.b16 %v216
        %v293 = vunpack.c.l.b16 %v217
        %v294 = vunpack.c.l.b16 %v218
        %v295 = vunpack.c.l.b16 %v219
        %v296 = vunpack.c.l.b16 %v220
        %v297 = vunpack.c.l.b16 %v221
        %v298 = vunpack.c.l.b16 %v222
        %v299 = vunpack.c.l.b16 %v223
        %v300 = vunpack.c.l.b16 %v224
        %v301 = vunpack.c.l.b16 %v225
        %v302 = vunpack.c.l.b16 %v226
        %v303 = vunpack.c.l.b16 %v227
        %v304 = vunpack.c.l.b16 %v228
        %v305 = vunpack.c.l.b16 %v229
        %v306 = vunpack.c.l.b16 %v230
        %v307 = vunpack.c.l.b16 %v231
        %v308 = vunpack.c.l.b16 %v232
        %v309 = vpack.c.b16 %v278, %v277
        %v310 = vpack.c.b16 %v280, %v279
        %v311 = vpack.c.b16 %v282, %v281
        %v312 = vpack.c.b16 %v284, %v283
        %v313 = vpack.c.b16 %v286, %v285
        %v314 = vpack.c.b16 %v288, %v287
        %v315 = vpack.c.b16 %v290, %v289
        %v316 = vpack.c.b16 %v292, %v291
        %v317 = vpack.c.b16 %v294, %v293
        %v318 = vpack.c.b16 %v296, %v295
        %v319 = vpack.c.b16 %v298, %v297
        %v320 = vpack.c.b16 %v300, %v299
        %v321 = vpack.c.b16 %v302, %v301
        %v322 = vpack.c.b16 %v304, %v303
        %v323 = vpack.c.b16 %v306, %v305
        %v324 = vpack.c.b16 %v308, %v307
        %v330 = vunpack.c.l.b16 %v233
        %v331 = vunpack.c.l.b16 %v234
        %v332 = vunpack.c.l.b16 %v235
        %v333 = vunpack.c.l.b16 %v236
        %v334 = vunpack.c.l.b16 %v237
        %v335 = vpack.c.b16 %v331, %v330
        %v336 = vpack.c.b16 %v333, %v332
        %v337 = vpack.c.b16 %v334, %v334
        %vm340 = vcmask 293888
        %v342 = vsel %vm340, %v309, 0
        %v345 = vsel %vm340, %v310, 0
        %v348 = vsel %vm340, %v311, 0
        %v351 = vsel %vm340, %v312, 0
        %v354 = vsel %vm340, %v313, 0
        %v357 = vsel %vm340, %v314, 0
        %v360 = vsel %vm340, %v315, 0
        %v363 = vsel %vm340, %v316, 0
        %v366 = vsel %vm340, %v317, 0
        %v369 = vsel %vm340, %v318, 0
        %v372 = vsel %vm340, %v319, 0
        %v375 = vsel %vm340, %v320, 0
        %v378 = vsel %vm340, %v321, 0
        %v381 = vsel %vm340, %v322, 0
        %v384 = vsel %vm340, %v323, 0
        %v387 = vsel %vm340, %v324, 0
        %vm389 = vcmask 1041408
        %v391 = vsel %vm389, %v337, 0
        %393 = vmatprep.subr.bf16.mxu0 0
        %394 = vmatpush1.bf16.msra.mxu0 0
        %395 = vmatprep.subr.bf16.mxu0 0
        %396 = vmatpush1.bf16.msra.mxu0 0
        %397 = vmatprep.subr.bf16.mxu0 0
        %398 = vmatpush1.bf16.msra.mxu0 0
        %399 = vmatprep.subr.bf16.mxu0 0
        %400 = vmatpush1.bf16.msra.mxu0 0
        %401 = vmatprep.subr.bf16.mxu0 0
        %402 = vmatpush1.bf16.msra.mxu0 0
        %403 = vmatprep.subr.bf16.mxu0 0
        %404 = vmatpush1.bf16.msra.mxu0 %v391
        %405 = vmatprep.subr.bf16.mxu0 0
        %406 = vmatpush1.bf16.msra.mxu0 %v336
        %407 = vmatprep.subr.bf16.mxu0 0
        %408 = vmatpush1.bf16.msra.mxu0 %v335
        %409 = vmatprep.subr.bf16.mxu0 0
        %410 = vmatpush2.bf16.msra.mxu0 0
        %411 = vmatprep.subr.bf16.mxu0 0
        %412 = vmatpush2.bf16.msra.mxu0 0
        %413 = vmatprep.subr.bf16.mxu0 0
        %414 = vmatpush2.bf16.msra.mxu0 0
        %415 = vmatprep.subr.bf16.mxu0 0
        %416 = vmatpush2.bf16.msra.mxu0 0
        %417 = vmatprep.subr.bf16.mxu0 0
        %418 = vmatpush2.bf16.msra.mxu0 0
        %419 = vmatprep.subr.bf16.mxu0 0
        %420 = vmatpush2.bf16.msra.mxu0 0
        %421 = vmatprep.subr.bf16.mxu0 0
        %422 = vmatpush2.bf16.msra.mxu0 0
        %423 = vmatprep.subr.bf16.mxu0 0
        %424 = vmatpush2.bf16.msra.mxu0 0
        %425 = vmatprep.mubr.bf16.mxu0 0
        %426 = vmatmul.mubr.bf16.gmra.mxu0 %v342
        %v427 = vpop.f32.mrf.mxu0
        %v428 = vadd.f32 %v243, %v427
        %v429 = vpop.f32.mrf.mxu0
        %v430 = vpop.f32.mrf.mxu0
        %v431 = vadd.f32 %v243, %v430
        %v432 = vpop.f32.mrf.mxu0
        %433 = vmatprep.mubr.bf16.mxu0 0
        %434 = vmatmul.mubr.bf16.gmra.mxu0 %v345
        %v435 = vpop.f32.mrf.mxu0
        %v436 = vadd.f32 %v243, %v435
        %v437 = vpop.f32.mrf.mxu0
        %v438 = vpop.f32.mrf.mxu0
        %v439 = vadd.f32 %v243, %v438
        %v440 = vpop.f32.mrf.mxu0
        %441 = vmatprep.mubr.bf16.mxu0 0
        %442 = vmatmul.mubr.bf16.gmra.mxu0 %v348
        %v443 = vpop.f32.mrf.mxu0
        %v444 = vadd.f32 %v243, %v443
        %v445 = vpop.f32.mrf.mxu0
        %v446 = vpop.f32.mrf.mxu0
        %v447 = vadd.f32 %v243, %v446
        %v448 = vpop.f32.mrf.mxu0
        %449 = vmatprep.mubr.bf16.mxu0 0
        %450 = vmatmul.mubr.bf16.gmra.mxu0 %v351
        %v451 = vpop.f32.mrf.mxu0
        %v452 = vadd.f32 %v243, %v451
        %v453 = vpop.f32.mrf.mxu0
        %v454 = vpop.f32.mrf.mxu0
        %v455 = vadd.f32 %v243, %v454
        %v456 = vpop.f32.mrf.mxu0
        %457 = vmatprep.mubr.bf16.mxu0 0
        %458 = vmatmul.mubr.bf16.gmra.mxu0 %v354
        %v459 = vpop.f32.mrf.mxu0
        %v460 = vadd.f32 %v243, %v459
        %v461 = vpop.f32.mrf.mxu0
        %v462 = vpop.f32.mrf.mxu0
        %v463 = vadd.f32 %v243, %v462
        %v464 = vpop.f32.mrf.mxu0
        %465 = vmatprep.mubr.bf16.mxu0 0
        %466 = vmatmul.mubr.bf16.gmra.mxu0 %v357
        %v467 = vpop.f32.mrf.mxu0
        %v468 = vadd.f32 %v243, %v467
        %v469 = vpop.f32.mrf.mxu0
        %v470 = vpop.f32.mrf.mxu0
        %v471 = vadd.f32 %v243, %v470
        %v472 = vpop.f32.mrf.mxu0
        %473 = vmatprep.mubr.bf16.mxu0 0
        %474 = vmatmul.mubr.bf16.gmra.mxu0 %v360
        %v475 = vpop.f32.mrf.mxu0
        %v476 = vadd.f32 %v243, %v475
        %v477 = vpop.f32.mrf.mxu0
        %v478 = vpop.f32.mrf.mxu0
        %v479 = vadd.f32 %v243, %v478
        %v480 = vpop.f32.mrf.mxu0
        %481 = vmatprep.mubr.bf16.mxu0 0
        %482 = vmatmul.mubr.bf16.gmra.mxu0 %v363
        %v483 = vpop.f32.mrf.mxu0
        %v484 = vadd.f32 %v243, %v483
        %v485 = vpop.f32.mrf.mxu0
        %v486 = vpop.f32.mrf.mxu0
        %v487 = vadd.f32 %v243, %v486
        %v488 = vpop.f32.mrf.mxu0
        %489 = vmatprep.mubr.bf16.mxu0 0
        %490 = vmatmul.mubr.bf16.gmra.mxu0 %v366
        %v491 = vpop.f32.mrf.mxu0
        %v492 = vadd.f32 %v243, %v491
        %v493 = vpop.f32.mrf.mxu0
        %v494 = vpop.f32.mrf.mxu0
        %v495 = vadd.f32 %v243, %v494
        %v496 = vpop.f32.mrf.mxu0
        %497 = vmatprep.mubr.bf16.mxu0 0
        %498 = vmatmul.mubr.bf16.gmra.mxu0 %v369
        %v499 = vpop.f32.mrf.mxu0
        %v500 = vadd.f32 %v243, %v499
        %v501 = vpop.f32.mrf.mxu0
        %v502 = vpop.f32.mrf.mxu0
        %v503 = vadd.f32 %v243, %v502
        %v504 = vpop.f32.mrf.mxu0
        %505 = vmatprep.mubr.bf16.mxu0 0
        %506 = vmatmul.mubr.bf16.gmra.mxu0 %v372
        %v507 = vpop.f32.mrf.mxu0
        %v508 = vadd.f32 %v243, %v507
        %v509 = vpop.f32.mrf.mxu0
        %v510 = vpop.f32.mrf.mxu0
        %v511 = vadd.f32 %v243, %v510
        %v512 = vpop.f32.mrf.mxu0
        %513 = vmatprep.mubr.bf16.mxu0 0
        %514 = vmatmul.mubr.bf16.gmra.mxu0 %v375
        %v515 = vpop.f32.mrf.mxu0
        %v516 = vadd.f32 %v243, %v515
        %v517 = vpop.f32.mrf.mxu0
        %v518 = vpop.f32.mrf.mxu0
        %v519 = vadd.f32 %v243, %v518
        %v520 = vpop.f32.mrf.mxu0
        %521 = vmatprep.mubr.bf16.mxu0 0
        %522 = vmatmul.mubr.bf16.gmra.mxu0 %v378
        %v523 = vpop.f32.mrf.mxu0
        %v524 = vadd.f32 %v243, %v523
        %v525 = vpop.f32.mrf.mxu0
        %v526 = vpop.f32.mrf.mxu0
        %v527 = vadd.f32 %v243, %v526
        %v528 = vpop.f32.mrf.mxu0
        %529 = vmatprep.mubr.bf16.mxu0 0
        %530 = vmatmul.mubr.bf16.gmra.mxu0 %v381
        %v531 = vpop.f32.mrf.mxu0
        %v532 = vadd.f32 %v243, %v531
        %v533 = vpop.f32.mrf.mxu0
        %v534 = vpop.f32.mrf.mxu0
        %v535 = vadd.f32 %v243, %v534
        %v536 = vpop.f32.mrf.mxu0
        %537 = vmatprep.mubr.bf16.mxu0 0
        %538 = vmatmul.mubr.bf16.gmra.mxu0 %v384
        %v539 = vpop.f32.mrf.mxu0
        %v540 = vadd.f32 %v243, %v539
        %v541 = vpop.f32.mrf.mxu0
        %v542 = vpop.f32.mrf.mxu0
        %v543 = vadd.f32 %v243, %v542
        %v544 = vpop.f32.mrf.mxu0
        %545 = vmatprep.mubr.bf16.mxu0 0
        %546 = vmatmul.mubr.bf16.gmra.mxu0 %v387
        %v547 = vpop.f32.mrf.mxu0
        %v548 = vadd.f32 %v243, %v547
        %v549 = vpop.f32.mrf.mxu0
        %v550 = vpop.f32.mrf.mxu0
        %v551 = vadd.f32 %v243, %v550
        %v552 = vpop.f32.mrf.mxu0
        %553 = vdwg.mxu0
        %554 = vst [vmem:[%s188] sm:$0xff] %v428
        %555 = vst [vmem:[%s188 + $0x8] sm:$0xff] %v431
        %556 = vst [vmem:[%s188 + $0x10] sm:$0xff] %v436
        %557 = vst [vmem:[%s188 + $0x18] sm:$0xff] %v439
        %558 = vst [vmem:[%s188 + $0x20] sm:$0xff] %v444
        %559 = vst [vmem:[%s188 + $0x28] sm:$0xff] %v447
        %560 = vst [vmem:[%s188 + $0x30] sm:$0xff] %v452
        %561 = vst [vmem:[%s188 + $0x38] sm:$0xff] %v455
        %562 = vst [vmem:[%s188 + $0x40] sm:$0xff] %v460
        %563 = vst [vmem:[%s188 + $0x48] sm:$0xff] %v463
        %564 = vst [vmem:[%s188 + $0x50] sm:$0xff] %v468
        %565 = vst [vmem:[%s188 + $0x58] sm:$0xff] %v471
        %566 = vst [vmem:[%s188 + $0x60] sm:$0xff] %v476
        %567 = vst [vmem:[%s188 + $0x68] sm:$0xff] %v479
        %568 = vst [vmem:[%s188 + $0x70] sm:$0xff] %v484
        %569 = vst [vmem:[%s188 + $0x78] sm:$0xff] %v487
        %570 = vst [vmem:[%s188 + $0x80] sm:$0xff] %v492
        %571 = vst [vmem:[%s188 + $0x88] sm:$0xff] %v495
        %572 = vst [vmem:[%s188 + $0x90] sm:$0xff] %v500
        %573 = vst [vmem:[%s188 + $0x98] sm:$0xff] %v503
        %574 = vst [vmem:[%s188 + $0xa0] sm:$0xff] %v508
        %575 = vst [vmem:[%s188 + $0xa8] sm:$0xff] %v511
        %576 = vst [vmem:[%s188 + $0xb0] sm:$0xff] %v516
        %577 = vst [vmem:[%s188 + $0xb8] sm:$0xff] %v519
        %578 = vst [vmem:[%s188 + $0xc0] sm:$0xff] %v524
        %579 = vst [vmem:[%s188 + $0xc8] sm:$0xff] %v527
        %580 = vst [vmem:[%s188 + $0xd0] sm:$0xff] %v532
        %581 = vst [vmem:[%s188 + $0xd8] sm:$0xff] %v535
        %582 = vst [vmem:[%s188 + $0xe0] sm:$0xff] %v540
        %583 = vst [vmem:[%s188 + $0xe8] sm:$0xff] %v543
        %584 = vst [vmem:[%s188 + $0xf0] sm:$0xff] %v548
        %585 = vst [vmem:[%s188 + $0xf8] sm:$0xff] %v551
        %s586 = sand.u32 %s109, 1
        %s587 = scalar_lea.sflag [#allocation3], %s586
        %s588 = sand.u32 %s109, 1
        %s589 = smul.addr %s588, 256
        %s590 = scalar_lea.vmem [#allocation2], %s589
        // Predicated region
        $region33: #{tpu_custom_call.1} parent=31 // pred_check
          %p591 = pneg %p119
        $region34: #{tpu_custom_call.1} parent=31 // pred_check_branch
          %593 = sbr.rel (%p591) target = $region36
        $region35: #{tpu_custom_call.1} parent=31 // pred_region
          %s594 = smul.u32 32, %s22
          %s596 = ssub.s32 4096, 4096
          %597 = vsyncadd %s587, %s596
          %s598 = smul.addr %s21, 32
          %s599 = sadd.s32 %s594, %s598
          %s600 = smul.addr %s599, 128
          %s601 = scalar_lea.hbm %s3, %s600
          %s602 = sshll.u32 %s590, 4
          %s603 = int_to_ptr.vmem [resolvable:$true] %s602
          %608 = dma.vmem_to_hbm [thread:$0]  %s603, 4096, %s601, %s587, 128, 128, 8
        $region36: #{tpu_custom_call.1} parent=31 // pred_fallthru
          _
      $region32: #{tpu_custom_call.1} parent=5 // pred_fallthru
        _
      %p609 = scmp.le.s32.totalorder 2, %s12
      // Predicated region
      $region37: #{tpu_custom_call.1} parent=5 // pred_check
        %p610 = pneg %p609
      $region38: #{tpu_custom_call.1} parent=5 // pred_check_branch
        %612 = sbr.rel (%p610) target = $region40
      $region39: #{tpu_custom_call.1} parent=5 // pred_region
        %s613 = ssub.s32 %s12, 2
        // Predicated region
        $region41: #{tpu_custom_call.1} parent=39 // pred_check
          %p614 = pneg %p125
        $region42: #{tpu_custom_call.1} parent=39 // pred_check_branch
          %616 = sbr.rel (%p614) target = $region44
        $region43: #{tpu_custom_call.1} parent=39 // pred_region
          %s617 = sand.u32 %s110, 1
          %s618 = scalar_lea.sflag [#allocation3], %s617
          %s619 = sand.u32 %s110, 1
          %s620 = smul.addr %s619, 256
          %s621 = scalar_lea.vmem [#allocation2], %s620
          %622 = dma.done %s618, 4096
        $region44: #{tpu_custom_call.1} parent=39 // pred_fallthru
          _
      $region40: #{tpu_custom_call.1} parent=5 // pred_fallthru
        _
    $region6: #{tpu_custom_call.1} parent=1 // loop_footer
      %s16 = sadd.s32 1, %s12
    $region7: #{tpu_custom_call.1} parent=1 // loop_footer_branch
      %11 = sbr.rel target = $region3
    $region8: #{tpu_custom_call.1} parent=1 // loop_exit
      _
    %623 = vsyncpa [#allocation3], 1
    %s624 = scalar_lea.sflag [#allocation3], 1
    %625 = vsyncpa %s624, 1

</llo_original>
